<compile_context>
chip_gen: v5e
topology: v5e:2x2
jax: 0.10.0
libtpu: 0.0.40
codegen_flags: <defaults>
</compile_context>

<pallas_src>
import functools

import jax
import jax.numpy as jnp
from jax.experimental import pallas as pl
from jax.experimental.pallas import tpu as pltpu

LANE = 128
_MEAN_BLOCK_ELEMS = 1024 * 1024        # 4 MiB f32 input per grid step
_ELEM_BLOCK_ELEMS = 1024 * 1024        # in + out are both double-buffered
_MAX_OUTER = 8                         # parallel slices for the mean path
_VMEM_LIMIT_BYTES = 48 * 1024 * 1024   # < v7x 64 MiB physical; >> v5e 16 MiB default


# --------------------------------------------------------------------------- #
# Kernels
# --------------------------------------------------------------------------- #
def _mean_kernel(x_ref, part_ref, acc_ref, *, block_rows, rows, n_blocks,
                 n_inner, ragged, overhang):
    """Accumulate sum of (|x-0.5|-0.5)^2 per outer slice into a (1, w) scratch."""
    o = pl.program_id(0)
    i = pl.program_id(1)
    blk = o * n_inner + i                      # logical block index (may overhang)

    @pl.when(i == 0)
    def _():
        acc_ref[...] = jnp.zeros_like(acc_ref)

    def _accumulate(mask_last_block):
        xb = x_ref[...]
        if jnp.issubdtype(xb.dtype, jnp.floating):
            # Native-dtype sub/abs/sub (bf16 VALU on v6e/v7x); square in f32.
            half = jnp.asarray(0.5, xb.dtype)
            t = (jnp.abs(xb - half) - half).astype(jnp.float32)
        else:
            xf = xb.astype(jnp.float32)
            t = jnp.abs(xf - 0.5) - 0.5
        l = t * t                              # == (|2x-1|-1)^2 / 4
        if mask_last_block:
            # Ragged last block: OOB rows hold garbage -> select (NOT multiply)
            # so NaN/Inf garbage cannot poison the sum.
            row = jax.lax.broadcasted_iota(jnp.int32, l.shape, 0) + blk * block_rows
            l = jnp.where(row < rows, l, 0.0)
        # Sublane reduce (VALU cross-vreg adds + one XLU tree reduce), then a
        # tiny (1, w) add -> no block-sized accumulator load/store traffic.
        acc_ref[...] += jnp.sum(l, axis=0, keepdims=True)

    if ragged:
        @pl.when(blk < n_blocks - 1)           # full blocks: no mask
        def _():
            _accumulate(False)

        @pl.when(blk == n_blocks - 1)          # ragged last block: masked
        def _():
            _accumulate(True)
    elif overhang:
        @pl.when(blk < n_blocks)               # skip overhanging (clamped) blocks
        def _():
            _accumulate(False)
    else:
        _accumulate(False)

    @pl.when(i == n_inner - 1)
    def _():
        # Write the per-slice partial into row 0 of the (8, w) output block.
        rid = jax.lax.broadcasted_iota(jnp.int32, part_ref.shape, 0)
        part_ref[...] = jnp.where(rid == 0, acc_ref[...], 0.0)


def _elementwise_kernel(x_ref, o_ref):
    s = 2.0 * x_ref[...].astype(jnp.float32) - 1.0
    t = jnp.abs(s) - 1.0
    o_ref[...] = (t * t).astype(o_ref.dtype)


# --------------------------------------------------------------------------- #
# Wrapper
# --------------------------------------------------------------------------- #
def _pick_lane_width(n):
    """Widest lane-dense width making the flat 2D view free (n % w == 0)."""
    for w in (2048, 1024, 512, 256, LANE):
        if n % w == 0:
            return w
    return LANE


def _fallback(x, reduction, out_dtype, is_float):
    # Single fused XLA pass for element counts that are not a multiple of 128:
    # avoids the pad-copy + kernel + slice-copy the 2D-slab kernel would need.
    xf = x.astype(jnp.float32)
    t = jnp.abs(2.0 * xf - 1.0) - 1.0
    l = t * t
    if reduction == "mean":
        m = jnp.mean(l)
        return m.astype(out_dtype) if is_float else m
    return l.astype(out_dtype)


def phase_transitions_potential(x, reduction="mean", *,
                                mean_block_elems=_MEAN_BLOCK_ELEMS,
                                elem_block_elems=_ELEM_BLOCK_ELEMS):
    """JAX/Pallas equivalent of PhaseTransitionsPotential.forward(x)."""
    # TODO(synk): the PyTorch module asserts 0 <= x <= 1 on host; assumed here.
    orig_shape = x.shape
    orig_dtype = x.dtype
    n = x.size

    is_float = jnp.issubdtype(orig_dtype, jnp.floating)
    out_dtype = orig_dtype if is_float else jnp.float32
    # TODO(synk): for non-floating inputs PyTorch keeps the integer dtype on the
    # 'none' path; we return f32 there.

    if n == 0 or n % LANE != 0:
        # TODO(synk): a 1-D ragged Pallas path would keep this in-kernel; the
        # fused XLA op is already a single HBM pass for this rare case.
        return _fallback(x, reduction, out_dtype, is_float)

    # Lane-dense 2D view of the flat tensor (free reshape; no padding ever).
    w = _pick_lane_width(n)
    x2d = x.reshape(-1, w)
    rows = x2d.shape[0]

    itemsize = jnp.dtype(orig_dtype).itemsize
    sub = {4: 8, 2: 16, 1: 32}.get(itemsize, 8)     # sublane packing granule

    if reduction == "mean":
        max_block_rows = max(sub, (mean_block_elems // w) // sub * sub)
        block_rows = rows if rows <= max_block_rows else max_block_rows
        n_blocks = pl.cdiv(rows, block_rows)
        ragged = (rows % block_rows) != 0           # only the last block

        # Robust 2-D (parallel, arbitrary) grid: never collapse to n_outer==1
        # just because n_blocks has no small divisor (keeps both v7x TCs busy).
        n_outer = min(_MAX_OUTER, n_blocks)
        n_inner = pl.cdiv(n_blocks, n_outer)
        n_outer = pl.cdiv(n_blocks, n_inner)        # drop empty trailing slices
        overhang = (n_outer * n_inner) != n_blocks

        if overhang:
            x_map = lambda o, i: (jnp.minimum(o * n_inner + i, n_blocks - 1), 0)
        else:
            x_map = lambda o, i: (o * n_inner + i, 0)

        partials = pl.pallas_call(
            functools.partial(_mean_kernel, block_rows=block_rows, rows=rows,
                              n_blocks=n_blocks, n_inner=n_inner,
                              ragged=ragged, overhang=overhang),
            out_shape=jax.ShapeDtypeStruct((n_outer * 8, w), jnp.float32),
            grid=(n_outer, n_inner),
            in_specs=[pl.BlockSpec((block_rows, w), x_map)],
            out_specs=pl.BlockSpec((8, w), lambda o, i: (o, 0)),
            scratch_shapes=[pltpu.VMEM((1, w), jnp.float32)],
            compiler_params=pltpu.CompilerParams(
                dimension_semantics=("parallel", "arbitrary"),
                vmem_limit_bytes=_VMEM_LIMIT_BYTES),
        )(x2d)
        # Kernel accumulates (|x-0.5|-0.5)^2 == l/4 -> fold the 4 back in here.
        mean = jnp.sum(partials) * jnp.float32(4.0 / n)
        return mean.astype(out_dtype) if is_float else mean

    # reduction != 'mean'  ->  elementwise l with the same shape as x.
    max_block_rows = max(sub, (elem_block_elems // w) // sub * sub)
    block_rows = rows if rows <= max_block_rows else max_block_rows
    n_blocks = pl.cdiv(rows, block_rows)            # ragged last block: OOB
    out2d = pl.pallas_call(                         # writes are clamped away
        _elementwise_kernel,
        out_shape=jax.ShapeDtypeStruct((rows, w), out_dtype),
        grid=(n_blocks,),
        in_specs=[pl.BlockSpec((block_rows, w), lambda i: (i, 0))],
        out_specs=pl.BlockSpec((block_rows, w), lambda i: (i, 0)),
        compiler_params=pltpu.CompilerParams(
            dimension_semantics=("parallel",),
            vmem_limit_bytes=_VMEM_LIMIT_BYTES),
    )(x2d)
    return out2d.reshape(orig_shape)                # rows*w == n: free reshape


# --------------------------------------------------------------------------- #
# Reference & self-test
# --------------------------------------------------------------------------- #
def _reference(x, reduction="mean"):
    s = 2.0 * x.astype(jnp.float32) - 1.0
    l = s * s - 2.0 * jnp.abs(s) + 1.0
    return jnp.mean(l) if reduction == "mean" else l


if __name__ == "__main__":
    k0, k1, k2 = jax.random.split(jax.random.PRNGKey(0), 3)

    # Case 1: canonical small NCHW input (lane-aligned element count).
    x1 = jax.random.uniform(k0, (2, 4, 16, 16), dtype=jnp.float32,
                            minval=0.0, maxval=1.0)
    m1 = jax.block_until_ready(phase_transitions_potential(x1, "mean"))
    assert jnp.allclose(m1, _reference(x1, "mean"), rtol=1e-5, atol=1e-5)
    e1 = jax.block_until_ready(phase_transitions_potential(x1, "none"))
    assert e1.shape == x1.shape and e1.dtype == x1.dtype
    assert jnp.allclose(e1, _reference(x1, "none"), rtol=1e-5, atol=1e-5)

    # Case 2: element count NOT a multiple of 128 -> fused-XLA fallback path.
    x2 = jax.random.uniform(k1, (2, 3, 17, 19), dtype=jnp.float32,
                            minval=0.0, maxval=1.0)
    assert jnp.allclose(phase_transitions_potential(x2, "mean"),
                        _reference(x2, "mean"), rtol=1e-5, atol=1e-5)
    assert jnp.allclose(phase_transitions_potential(x2, "none"),
                        _reference(x2, "none"), rtol=1e-5, atol=1e-5)

    # Case 3: tiny blocks -> ragged masked last block + clamped/overhanging
    # blocks on the (parallel, arbitrary) mean grid (grid 5x2 over 9 blocks).
    x3 = jax.random.uniform(k2, (65, 128), dtype=jnp.float32,
                            minval=0.0, maxval=1.0)
    m3 = jax.block_until_ready(
        phase_transitions_potential(x3, "mean", mean_block_elems=1024))
    assert jnp.allclose(m3, _reference(x3, "mean"), rtol=1e-5, atol=1e-5)
    e3 = jax.block_until_ready(
        phase_transitions_potential(x3, "none", elem_block_elems=1024))
    assert jnp.allclose(e3, _reference(x3, "none"), rtol=1e-5, atol=1e-5)

    # Case 4: native bf16 I/O (no wrapper-side upcast; bf16 VALU pre-square).
    x4 = x1.astype(jnp.bfloat16)
    m4 = jax.block_until_ready(phase_transitions_potential(x4, "mean"))
    assert m4.dtype == jnp.bfloat16
    assert jnp.allclose(m4.astype(jnp.float32), _reference(x4, "mean"), atol=2e-2)

    print("KERNEL_OK")
</pallas_src>

<mosaic_0001>
module attributes {stable_mosaic.version = 11 : i64} {
  func.func @_mean_kernel(%arg0: i32, %arg1: i32, %arg2: memref<1x2048xf32, #tpu.memory_space<vmem>>, %arg3: memref<8x2048xf32, #tpu.memory_space<vmem>>, %arg4: memref<1x2048xf32, #tpu.memory_space<vmem>>) attributes {dimension_semantics = [#tpu.dimension_semantics<parallel>, #tpu.dimension_semantics<arbitrary>], iteration_bounds = array<i64: 1, 1>, scalar_prefetch = 0 : i64, scratch_operands = 1 : i64, tpu.core_type = #tpu.core_type<tc>, window_params = [{transform_indices = @transform_0, window_bounds = array<i64: 1, 2048>}, {transform_indices = @transform_1, window_bounds = array<i64: 8, 2048>}]} {
    %c0_i32 = arith.constant 0 : i32
    %0 = arith.cmpi eq, %arg1, %c0_i32 : i32
    %1 = arith.extui %0 : i1 to i32
    %c0_i32_0 = arith.constant 0 : i32
    %2 = arith.cmpi ne, %1, %c0_i32_0 : i32
    scf.if %2 {
      %cst_10 = arith.constant 0.000000e+00 : f32
      %18 = vector.broadcast %cst_10 : f32 to vector<1x2048xf32>
      %c0_11 = arith.constant 0 : index
      %c0_12 = arith.constant 0 : index
      %19 = vector.load %arg4[%c0_11, %c0_12] : memref<1x2048xf32, #tpu.memory_space<vmem>>, vector<1x2048xf32>
      tpu.vector_store %arg4[%c0_11, %c0_12], %18 {strides = array<i32>} : memref<1x2048xf32, #tpu.memory_space<vmem>>, vector<1x2048xf32>,
    } else {
    }
    %c0 = arith.constant 0 : index
    %c0_1 = arith.constant 0 : index
    %3 = vector.load %arg2[%c0, %c0_1] : memref<1x2048xf32, #tpu.memory_space<vmem>>, vector<1x2048xf32>
    %cst = arith.constant 5.000000e-01 : f32
    %4 = vector.broadcast %cst : f32 to vector<1x2048xf32>
    %5 = arith.subf %3, %4 : vector<1x2048xf32>
    %6 = math.absf %5 : vector<1x2048xf32>
    %cst_2 = arith.constant 5.000000e-01 : f32
    %7 = vector.broadcast %cst_2 : f32 to vector<1x2048xf32>
    %8 = arith.subf %6, %7 : vector<1x2048xf32>
    %9 = arith.mulf %8, %8 : vector<1x2048xf32>
    %c0_3 = arith.constant 0 : index
    %c0_4 = arith.constant 0 : index
    %10 = vector.load %arg4[%c0_3, %c0_4] : memref<1x2048xf32, #tpu.memory_space<vmem>>, vector<1x2048xf32>
    %cst_5 = arith.constant dense<0.000000e+00> : vector<2048xf32>
    %11 = vector.multi_reduction <add>, %9, %cst_5 [0] : vector<1x2048xf32> to vector<2048xf32>
    %12 = vector.shape_cast %11 : vector<2048xf32> to vector<1x2048xf32>
    %13 = arith.addf %10, %12 : vector<1x2048xf32>
    %c0_6 = arith.constant 0 : index
    %c0_7 = arith.constant 0 : index
    %14 = vector.load %arg4[%c0_6, %c0_7] : memref<1x2048xf32, #tpu.memory_space<vmem>>, vector<1x2048xf32>
    tpu.vector_store %arg4[%c0_6, %c0_7], %13 {strides = array<i32>} : memref<1x2048xf32, #tpu.memory_space<vmem>>, vector<1x2048xf32>,
    %c0_i32_8 = arith.constant 0 : i32
    %15 = arith.cmpi eq, %arg1, %c0_i32_8 : i32
    %16 = arith.extui %15 : i1 to i32
    %c0_i32_9 = arith.constant 0 : i32
    %17 = arith.cmpi ne, %16, %c0_i32_9 : i32
    scf.if %17 {
      %18 = tpu.iota {dimensions = array<i32: 0>} : vector<8x2048xi32>
      %c0_i32_10 = arith.constant 0 : i32
      %19 = vector.broadcast %c0_i32_10 : i32 to vector<8x2048xi32>
      %20 = arith.cmpi eq, %18, %19 : vector<8x2048xi32>
      %c0_11 = arith.constant 0 : index
      %c0_12 = arith.constant 0 : index
      %21 = vector.load %arg4[%c0_11, %c0_12] : memref<1x2048xf32, #tpu.memory_space<vmem>>, vector<1x2048xf32>
      %cst_13 = arith.constant 0.000000e+00 : f32
      %22 = vector.shape_cast %21 : vector<1x2048xf32> to vector<1x2048xf32>
      %23 = vector.broadcast %22 : vector<1x2048xf32> to vector<8x2048xf32>
      %24 = vector.broadcast %cst_13 : f32 to vector<8x2048xf32>
      %25 = arith.select %20, %23, %24 : vector<8x2048xi1>, vector<8x2048xf32>
      %c0_14 = arith.constant 0 : index
      %c0_15 = arith.constant 0 : index
      %26 = vector.load %arg3[%c0_14, %c0_15] : memref<8x2048xf32, #tpu.memory_space<vmem>>, vector<8x2048xf32>
      tpu.vector_store %arg3[%c0_14, %c0_15], %25 {strides = array<i32>} : memref<8x2048xf32, #tpu.memory_space<vmem>>, vector<8x2048xf32>,
    } else {
    }
    return
  }
  func.func @transform_0(%arg0: i32, %arg1: i32) -> (i32, i32) {
    %c1_i32 = arith.constant 1 : i32
    %0 = arith.muli %arg0, %c1_i32 : i32
    %1 = arith.addi %0, %arg1 : i32
    %c0_i32 = arith.constant 0 : i32
    %c0_i32_0 = arith.constant 0 : i32
    return %1, %c0_i32 : i32, i32
  }
  func.func @transform_1(%arg0: i32, %arg1: i32) -> (i32, i32) {
    %c0_i32 = arith.constant 0 : i32
    %c0_i32_0 = arith.constant 0 : i32
    return %arg0, %c0_i32 : i32, i32
  }
}

</mosaic_0001>

<llo_original>
// kernel: tpu_custom_call.1
$region0: #{tpu_custom_call.1}
  #allocation0 [shape = 'u32[]', space=smem, size = 0x4, offset = 0x4, fixed_abs, tag = 'smem constant byte address 0x4 - core index']
  #allocation1 [shape = 'u32[72,128]{1,0:T(1,128)}', space=vmem, size = 0x9000, scoped, tag = 'internal scratch']
  #allocation2 [shape = 'f32[1,2048]{1,0:T(1,128)}', space=vmem, size = 0x2000, scoped, tag = 'scratch operand']
  %s0 = inlined_call_operand.hbm [shape: f32[1,2048], index: 0, kind: input, shape index: {}]
  %s1 = inlined_call_operand.hbm [shape: f32[8,2048], index: 1, kind: output, shape index: {}]
  %s2 = sld [smem:[#allocation0]]
  $region26: #{tpu_custom_call.1} parent=0
    _
  %s4 = ssub.s32 1, %s2
  %s5 = scalar_select 0, %s4, %s2
  $region1: #{tpu_custom_call.1} parent=0
    #allocation3 [shape = 'u8[8192]{0}', space=vmem, size = 0x2000, scoped, tag = 'input window, operand 0, single buffered']
    #allocation4 [shape = 's32[1]{0}', space=sflag, size = 0x4, scoped, tag = 'scoped memory for tpu_custom_call.1']
    #allocation5 [shape = 's32[1]{0}', space=sflag, size = 0x4, scoped, tag = 'scoped memory for tpu_custom_call.1']
    #allocation6 [shape = 'u8[65536]{0}', space=vmem, size = 0x10000, scoped, tag = 'output window, operand 0, single buffered']
    %6 = vsyncpa [#allocation4], 0
    %7 = vsyncpa [#allocation5], 0
    // Predicated region
    $region2: #{tpu_custom_call.1} parent=1 // pred_check
      _
    $region3: #{tpu_custom_call.1} parent=1 // pred_check_branch
      %9 = sbr.rel (0) target = $region5
    $region4: #{tpu_custom_call.1} parent=1 // pred_region
      %s10 = sadd.s32 0, 0
      %12 = vsyncadd [#allocation4], 0
      %s13 = smul.addr %s10, 16
      %s14 = scalar_lea.hbm %s0, %s13
      %s16 = sshll.u32 %s14, 4
      %s17 = int_to_ptr.hbm [resolvable:$true] %s16
      %s18 = sshll.u32 [#allocation3], 4
      %s19 = int_to_ptr.vmem [resolvable:$true] %s18
      %21 = dma.hbm_to_vmem [thread:$0]  %s17, 256, %s19, [#allocation4]
    $region5: #{tpu_custom_call.1} parent=1 // pred_fallthru
      _
    // Predicated region
    $region6: #{tpu_custom_call.1} parent=1 // pred_check
      _
    $region7: #{tpu_custom_call.1} parent=1 // pred_check_branch
      %23 = sbr.rel (0) target = $region9
    $region8: #{tpu_custom_call.1} parent=1 // pred_region
      %25 = dma.done [#allocation4], 256
    $region9: #{tpu_custom_call.1} parent=1 // pred_fallthru
      _
    %s26 = sadd.s32 0, 0
    %p27 = scmp.eq.s32.totalorder 0, 0
    // Predicated region
    $region10: #{tpu_custom_call.1} parent=1 // pred_check
      %p28 = pneg %p27
    $region11: #{tpu_custom_call.1} parent=1 // pred_check_branch
      %30 = sbr.rel (%p28) target = $region13
    $region12: #{tpu_custom_call.1} parent=1 // pred_region
      %31 = vst [vmem:[#allocation2] sm:$0xff] 0.0
      %32 = vst [vmem:[#allocation2 + $0x8] sm:$0xff] 0.0
    $region13: #{tpu_custom_call.1} parent=1 // pred_fallthru
      _
    %v33 = vld [vmem:[#allocation3] sm:$0xff]
    %v34 = vld [vmem:[#allocation3 + $0x8] sm:$0xff]
    %v35 = vsub.f32 %v33, 0.5
    %v36 = vsub.f32 %v34, 0.5
    %v37 = vand.u32 2147483647, %v35
    %v38 = vand.u32 2147483647, %v36
    %v39 = vsub.f32 %v37, 0.5
    %v40 = vsub.f32 %v38, 0.5
    %v41 = vmul.f32 %v39, %v39
    %v42 = vmul.f32 %v40, %v40
    %v43 = vld [vmem:[#allocation2] sm:$0xff]
    %v44 = vld [vmem:[#allocation2 + $0x8] sm:$0xff]
    %v45 = vadd.f32 %v41, 0.0
    %v46 = vadd.f32 %v42, 0.0
    %v47 = vadd.f32 %v43, %v45
    %v48 = vadd.f32 %v44, %v46
    %49 = vst [vmem:[#allocation2] sm:$0xff] %v47
    %50 = vst [vmem:[#allocation2 + $0x8] sm:$0xff] %v48
    // Predicated region
    $region14: #{tpu_custom_call.1} parent=1 // pred_check
      %p51 = pneg %p27
    $region15: #{tpu_custom_call.1} parent=1 // pred_check_branch
      %53 = sbr.rel (%p51) target = $region17
    $region16: #{tpu_custom_call.1} parent=1 // pred_region
      %v54 = vlaneseq
      %v55 = vshrl.u32 %v54, 7
      %vm56 = vcmp.eq.s32.totalorder %v55, 0
      %v57 = vld [vmem:[#allocation2] sm:$0xff]
      %v58 = vld [vmem:[#allocation2 + $0x8] sm:$0xff]
      %v61 = vperm.slane %v57, 0
      %v62 = vperm.slane %v57, 1
      %v63 = vperm.slane %v57, 2
      %v64 = vperm.slane %v57, 3
      %v65 = vperm.slane %v57, 4
      %v66 = vperm.slane %v57, 5
      %v67 = vperm.slane %v57, 6
      %v68 = vperm.slane %v57, 7
      %v69 = vperm.slane %v58, 0
      %v70 = vperm.slane %v58, 1
      %v71 = vperm.slane %v58, 2
      %v72 = vperm.slane %v58, 3
      %v73 = vperm.slane %v58, 4
      %v74 = vperm.slane %v58, 5
      %v75 = vperm.slane %v58, 6
      %v76 = vperm.slane %v58, 7
      %v93 = vsel %vm56, %v61, 0.0
      %v94 = vsel %vm56, %v62, 0.0
      %v95 = vsel %vm56, %v63, 0.0
      %v96 = vsel %vm56, %v64, 0.0
      %v97 = vsel %vm56, %v65, 0.0
      %v98 = vsel %vm56, %v66, 0.0
      %v99 = vsel %vm56, %v67, 0.0
      %v100 = vsel %vm56, %v68, 0.0
      %v101 = vsel %vm56, %v69, 0.0
      %v102 = vsel %vm56, %v70, 0.0
      %v103 = vsel %vm56, %v71, 0.0
      %v104 = vsel %vm56, %v72, 0.0
      %v105 = vsel %vm56, %v73, 0.0
      %v106 = vsel %vm56, %v74, 0.0
      %v107 = vsel %vm56, %v75, 0.0
      %v108 = vsel %vm56, %v76, 0.0
      %109 = vst [vmem:[#allocation6] sm:$0xff] %v93
      %110 = vst [vmem:[#allocation6 + $0x8] sm:$0xff] %v94
      %111 = vst [vmem:[#allocation6 + $0x10] sm:$0xff] %v95
      %112 = vst [vmem:[#allocation6 + $0x18] sm:$0xff] %v96
      %113 = vst [vmem:[#allocation6 + $0x20] sm:$0xff] %v97
      %114 = vst [vmem:[#allocation6 + $0x28] sm:$0xff] %v98
      %115 = vst [vmem:[#allocation6 + $0x30] sm:$0xff] %v99
      %116 = vst [vmem:[#allocation6 + $0x38] sm:$0xff] %v100
      %117 = vst [vmem:[#allocation6 + $0x40] sm:$0xff] %v101
      %118 = vst [vmem:[#allocation6 + $0x48] sm:$0xff] %v102
      %119 = vst [vmem:[#allocation6 + $0x50] sm:$0xff] %v103
      %120 = vst [vmem:[#allocation6 + $0x58] sm:$0xff] %v104
      %121 = vst [vmem:[#allocation6 + $0x60] sm:$0xff] %v105
      %122 = vst [vmem:[#allocation6 + $0x68] sm:$0xff] %v106
      %123 = vst [vmem:[#allocation6 + $0x70] sm:$0xff] %v107
      %124 = vst [vmem:[#allocation6 + $0x78] sm:$0xff] %v108
    $region17: #{tpu_custom_call.1} parent=1 // pred_fallthru
      _
    // Predicated region
    $region18: #{tpu_custom_call.1} parent=1 // pred_check
      _
    $region19: #{tpu_custom_call.1} parent=1 // pred_check_branch
      %126 = sbr.rel (0) target = $region21
    $region20: #{tpu_custom_call.1} parent=1 // pred_region
      %128 = vsyncadd [#allocation5], 0
      %s130 = sshll.u32 [#allocation6], 4
      %s131 = int_to_ptr.vmem [resolvable:$true] %s130
      %s132 = sshll.u32 %s1, 4
      %s133 = int_to_ptr.hbm [resolvable:$true] %s132
      %135 = dma.vmem_to_hbm [thread:$0]  %s131, 2048, %s133, [#allocation5]
    $region21: #{tpu_custom_call.1} parent=1 // pred_fallthru
      _
    // Predicated region
    $region22: #{tpu_custom_call.1} parent=1 // pred_check
      _
    $region23: #{tpu_custom_call.1} parent=1 // pred_check_branch
      %137 = sbr.rel (0) target = $region25
    $region24: #{tpu_custom_call.1} parent=1 // pred_region
      %139 = dma.done [#allocation5], 2048
    $region25: #{tpu_custom_call.1} parent=1 // pred_fallthru
      _
    %140 = vsyncpa [#allocation4], 1
    %141 = vsyncpa [#allocation5], 1

</llo_original>
